<compile_context>
chip_gen: v5e
topology: v5e:2x2
jax: 0.10.0
libtpu: 0.0.40
codegen_flags: <defaults>
</compile_context>

<pallas_src>
import jax
import jax.numpy as jnp
from jax.experimental import pallas as pl
from jax.experimental.pallas import tpu as pltpu

IN_FEATURES = 196   # 14 * 14
HIDDEN = 16
CLASSES = 10

# Batch tile.  The kernel is HBM-bandwidth-bound on the x stream, so the tile
# is sized to amortize the ~0.35 us per-grid-step overhead while keeping the
# double-buffered working set inside scoped VMEM on every generation:
#   x  f32 tile : TB x 256 lanes x 4 B = TB KiB   per buffer (196 lane-padded to 256)
#   out bf16    : TB x 128 lanes x 2 B = TB/4 KiB per buffer (10 lane-padded to 128)
# TB = 8192 -> ~20.5 MiB double-buffered + ~0.2 MiB resident weights: fits
# v7x's 64 MiB physical / 32 MiB scoped VMEM with headroom, and is large
# enough on v6e/v5e that per-step overhead is <10% of the per-step DMA.
TB_MAX = 8192
VMEM_LIMIT_BYTES = 32 * 1024 * 1024   # v5e default scoped limit is 16 MiB; raise it.


def _round_up(x, m):
    return (x + m - 1) // m * m


def chead_kernel(x_ref, w1_ref, b1_ref, w2_ref, b2_ref, o_ref):
    # All-f32 compute: at ~15 FLOPs/byte the MXU is idle >95% of the time, so
    # f32 matmuls cost nothing extra and remove every quantization source
    # (no bf16 cast of x, no h.astype(bf16) before fc2).
    h = jnp.dot(x_ref[...], w1_ref[...], preferred_element_type=jnp.float32)
    h = jnp.maximum(h + b1_ref[...], 0.0)
    logits = jnp.dot(h, w2_ref[...], preferred_element_type=jnp.float32) + b2_ref[...]
    # Numerically stable softmax over classes (dim=1).  Exact division so rows
    # sum to 1 up to rounding; the cost is hidden under the x DMA anyway.
    m = jnp.max(logits, axis=1, keepdims=True)
    e = jnp.exp(logits - m)
    probs = e / jnp.sum(e, axis=1, keepdims=True)
    o_ref[...] = probs.astype(o_ref.dtype)


def chead_forward(x_nchw, w1, b1, w2, b2, *, tb=TB_MAX, out_dtype=jnp.bfloat16):
    # View((-1, 196)): pure metadata reshape, identical to x.view(*self.shape).
    B = x_nchw.shape[0]
    x_flat = jnp.reshape(x_nchw, (B, -1))
    assert x_flat.shape[1] == IN_FEATURES

    # Pad the batch only to a multiple of 16 (a no-op for typical batch sizes),
    # never to a multiple of TB; Pallas masks the ragged last grid block.
    Bp = _round_up(max(B, 16), 16)
    if Bp != B:
        x_flat = jnp.pad(x_flat, ((0, Bp - B), (0, 0)))

    TB = min(_round_up(tb, 16), Bp)
    grid = pl.cdiv(Bp, TB)

    w1 = w1.astype(jnp.float32)
    b1 = b1.astype(jnp.float32).reshape(1, HIDDEN)
    w2 = w2.astype(jnp.float32)
    b2 = b2.astype(jnp.float32).reshape(1, CLASSES)

    cost = pl.CostEstimate(
        flops=2 * Bp * (IN_FEATURES * HIDDEN + HIDDEN * CLASSES),
        transcendentals=Bp * CLASSES,
        bytes_accessed=(Bp * IN_FEATURES * x_flat.dtype.itemsize
                        + Bp * CLASSES * jnp.dtype(out_dtype).itemsize
                        + (IN_FEATURES * HIDDEN + HIDDEN
                           + HIDDEN * CLASSES + CLASSES) * 4),
    )

    out = pl.pallas_call(
        chead_kernel,
        out_shape=jax.ShapeDtypeStruct((Bp, CLASSES), out_dtype),
        grid_spec=pltpu.PrefetchScalarGridSpec(
            num_scalar_prefetch=0,
            grid=(grid,),
            in_specs=[
                # x streamed per batch tile in its native dtype; Pallas
                # double-buffers the DMA.
                pl.BlockSpec((TB, IN_FEATURES), lambda i: (i, 0)),
                # Weights/biases: constant index_map -> DMA'd once, resident.
                pl.BlockSpec((IN_FEATURES, HIDDEN), lambda i: (0, 0)),
                pl.BlockSpec((1, HIDDEN), lambda i: (0, 0)),
                pl.BlockSpec((HIDDEN, CLASSES), lambda i: (0, 0)),
                pl.BlockSpec((1, CLASSES), lambda i: (0, 0)),
            ],
            # Narrow (TB, 10) output: CLASSES equals the full array dim so the
            # (8,128) constraint is satisfied; bf16 halves the writeback
            # traffic and the lane-padded output VMEM footprint.
            out_specs=pl.BlockSpec((TB, CLASSES), lambda i: (i, 0)),
        ),
        compiler_params=pltpu.CompilerParams(
            # Batch axis is embarrassingly parallel; no-op on 1-TC chips and
            # the kernel stays HBM-bound either way.
            # TODO(synk): on v7x, confirm in a trace that both TensorCores
            # stream disjoint batch tiles (pltpu.CORE_PARALLEL / core_map);
            # do not trade tile size for core parallelism.
            dimension_semantics=("parallel",),
            vmem_limit_bytes=VMEM_LIMIT_BYTES,
        ),
        cost_estimate=cost,
    )(x_flat, w1, b1, w2, b2)
    return out[:B]


def init_params():
    key = jax.random.PRNGKey(0)
    k1, k2, k3, k4 = jax.random.split(key, 4)
    # Deterministic, PyTorch-Linear-like uniform init (bound = 1/sqrt(fan_in)),
    # stored as (in, out) so the kernel computes x @ w.
    bound1 = 1.0 / jnp.sqrt(jnp.float32(IN_FEATURES))
    bound2 = 1.0 / jnp.sqrt(jnp.float32(HIDDEN))
    w1 = jax.random.uniform(k1, (IN_FEATURES, HIDDEN), jnp.float32, -bound1, bound1)
    b1 = jax.random.uniform(k2, (1, HIDDEN), jnp.float32, -bound1, bound1)
    w2 = jax.random.uniform(k3, (HIDDEN, CLASSES), jnp.float32, -bound2, bound2)
    b2 = jax.random.uniform(k4, (1, CLASSES), jnp.float32, -bound2, bound2)
    return w1, b1, w2, b2


if __name__ == "__main__":
    key = jax.random.PRNGKey(0)
    # Input consistent with 196 flat features per example: [B, 1, 14, 14]
    x = jax.random.uniform(key, (8, 1, 14, 14), jnp.float32)
    w1, b1, w2, b2 = init_params()

    out = chead_forward(x, w1, b1, w2, b2)
    out = jax.block_until_ready(out)

    # Pure-JAX f32 reference (View == reshape, then fc1/ReLU/fc2/softmax).
    x_flat_ref = x.reshape(8, -1)
    h_ref = jnp.maximum(x_flat_ref @ w1 + b1, 0.0)
    ref = jax.nn.softmax(h_ref @ w2 + b2, axis=1)

    assert out.shape == (8, CLASSES)
    outf = out.astype(jnp.float32)
    row_sums = jnp.sum(outf, axis=1)
    assert bool(jnp.all(jnp.abs(row_sums - 1.0) < 1e-2))
    # All-f32 in-kernel compute; only bf16 output rounding separates it from ref.
    assert bool(jnp.allclose(outf, ref, atol=1e-2))
    print("KERNEL_OK")
</pallas_src>

<mosaic_0001>
module attributes {stable_mosaic.version = 11 : i64} {
  func.func @chead_kernel(%arg0: i32, %arg1: memref<16x196xf32, #tpu.memory_space<vmem>>, %arg2: memref<196x16xf32, #tpu.memory_space<vmem>>, %arg3: memref<1x16xf32, #tpu.memory_space<vmem>>, %arg4: memref<16x10xf32, #tpu.memory_space<vmem>>, %arg5: memref<1x10xf32, #tpu.memory_space<vmem>>, %arg6: memref<16x10xbf16, #tpu.memory_space<vmem>>) attributes {dimension_semantics = [#tpu.dimension_semantics<parallel>], iteration_bounds = array<i64: 1>, scalar_prefetch = 0 : i64, scratch_operands = 0 : i64, tpu.core_type = #tpu.core_type<tc>, window_params = [{transform_indices = @transform_0, window_bounds = array<i64: 16, 196>}, {pipeline_mode = #tpu.pipeline_mode<synchronous>, transform_indices = @transform_1, window_bounds = array<i64: 196, 16>}, {pipeline_mode = #tpu.pipeline_mode<synchronous>, transform_indices = @transform_2, window_bounds = array<i64: 1, 16>}, {pipeline_mode = #tpu.pipeline_mode<synchronous>, transform_indices = @transform_3, window_bounds = array<i64: 16, 10>}, {pipeline_mode = #tpu.pipeline_mode<synchronous>, transform_indices = @transform_4, window_bounds = array<i64: 1, 10>}, {transform_indices = @transform_5, window_bounds = array<i64: 16, 10>}]} {
    %c0 = arith.constant 0 : index
    %c0_0 = arith.constant 0 : index
    %0 = vector.load %arg1[%c0, %c0_0] : memref<16x196xf32, #tpu.memory_space<vmem>>, vector<16x196xf32>
    %c0_1 = arith.constant 0 : index
    %c0_2 = arith.constant 0 : index
    %1 = vector.load %arg2[%c0_1, %c0_2] : memref<196x16xf32, #tpu.memory_space<vmem>>, vector<196x16xf32>
    %cst = arith.constant dense<0.000000e+00> : vector<16x16xf32>
    %2 = tpu.matmul %0, %1, %cst {dimension_numbers = #tpu.dot_dimension_numbers<[1], [0], [0], [1], [0, 0, 1, 1], [], []>} : vector<16x196xf32>, vector<196x16xf32>, vector<16x16xf32> -> vector<16x16xf32>
    %c0_3 = arith.constant 0 : index
    %c0_4 = arith.constant 0 : index
    %3 = vector.load %arg3[%c0_3, %c0_4] : memref<1x16xf32, #tpu.memory_space<vmem>>, vector<1x16xf32>
    %4 = vector.broadcast %3 : vector<1x16xf32> to vector<16x16xf32>
    %5 = arith.addf %2, %4 : vector<16x16xf32>
    %cst_5 = arith.constant 0.000000e+00 : f32
    %6 = vector.broadcast %cst_5 : f32 to vector<16x16xf32>
    %7 = arith.maximumf %5, %6 : vector<16x16xf32>
    %c0_6 = arith.constant 0 : index
    %c0_7 = arith.constant 0 : index
    %8 = vector.load %arg4[%c0_6, %c0_7] : memref<16x10xf32, #tpu.memory_space<vmem>>, vector<16x10xf32>
    %cst_8 = arith.constant dense<0.000000e+00> : vector<16x10xf32>
    %9 = tpu.matmul %7, %8, %cst_8 {dimension_numbers = #tpu.dot_dimension_numbers<[1], [0], [0], [1], [0, 0, 1, 1], [], []>} : vector<16x16xf32>, vector<16x10xf32>, vector<16x10xf32> -> vector<16x10xf32>
    %c0_9 = arith.constant 0 : index
    %c0_10 = arith.constant 0 : index
    %10 = vector.load %arg5[%c0_9, %c0_10] : memref<1x10xf32, #tpu.memory_space<vmem>>, vector<1x10xf32>
    %11 = vector.broadcast %10 : vector<1x10xf32> to vector<16x10xf32>
    %12 = arith.addf %9, %11 : vector<16x10xf32>
    %cst_11 = arith.constant dense<0xFF800000> : vector<16xf32>
    %13 = vector.multi_reduction <maximumf>, %12, %cst_11 [1] : vector<16x10xf32> to vector<16xf32>
    %14 = vector.shape_cast %13 : vector<16xf32> to vector<16x1xf32>
    %15 = vector.broadcast %14 : vector<16x1xf32> to vector<16x10xf32>
    %16 = arith.subf %12, %15 : vector<16x10xf32>
    %17 = math.exp %16 : vector<16x10xf32>
    %cst_12 = arith.constant dense<0.000000e+00> : vector<16xf32>
    %18 = vector.multi_reduction <add>, %17, %cst_12 [1] : vector<16x10xf32> to vector<16xf32>
    %19 = vector.shape_cast %18 : vector<16xf32> to vector<16x1xf32>
    %20 = vector.broadcast %19 : vector<16x1xf32> to vector<16x10xf32>
    %21 = arith.divf %17, %20 : vector<16x10xf32>
    %22 = arith.truncf %21 : vector<16x10xf32> to vector<16x10xbf16>
    %c0_13 = arith.constant 0 : index
    %c0_14 = arith.constant 0 : index
    %23 = vector.load %arg6[%c0_13, %c0_14] : memref<16x10xbf16, #tpu.memory_space<vmem>>, vector<16x10xbf16>
    tpu.vector_store %arg6[%c0_13, %c0_14], %22 {strides = array<i32>} : memref<16x10xbf16, #tpu.memory_space<vmem>>, vector<16x10xbf16>,
    return
  }
  func.func @transform_0(%arg0: i32) -> (i32, i32) {
    %c0_i32 = arith.constant 0 : i32
    %c0_i32_0 = arith.constant 0 : i32
    return %arg0, %c0_i32 : i32, i32
  }
  func.func @transform_1(%arg0: i32) -> (i32, i32) {
    %c0_i32 = arith.constant 0 : i32
    %c0_i32_0 = arith.constant 0 : i32
    %c0_i32_1 = arith.constant 0 : i32
    return %c0_i32, %c0_i32_0 : i32, i32
  }
  func.func @transform_2(%arg0: i32) -> (i32, i32) {
    %c0_i32 = arith.constant 0 : i32
    %c0_i32_0 = arith.constant 0 : i32
    %c0_i32_1 = arith.constant 0 : i32
    return %c0_i32, %c0_i32_0 : i32, i32
  }
  func.func @transform_3(%arg0: i32) -> (i32, i32) {
    %c0_i32 = arith.constant 0 : i32
    %c0_i32_0 = arith.constant 0 : i32
    %c0_i32_1 = arith.constant 0 : i32
    return %c0_i32, %c0_i32_0 : i32, i32
  }
  func.func @transform_4(%arg0: i32) -> (i32, i32) {
    %c0_i32 = arith.constant 0 : i32
    %c0_i32_0 = arith.constant 0 : i32
    %c0_i32_1 = arith.constant 0 : i32
    return %c0_i32, %c0_i32_0 : i32, i32
  }
  func.func @transform_5(%arg0: i32) -> (i32, i32) {
    %c0_i32 = arith.constant 0 : i32
    %c0_i32_0 = arith.constant 0 : i32
    return %arg0, %c0_i32 : i32, i32
  }
}

</mosaic_0001>

<llo_original>
// kernel: tpu_custom_call.1
$region0: #{tpu_custom_call.1}
  #allocation0 [shape = 'u32[]', space=smem, size = 0x4, offset = 0x4, fixed_abs, tag = 'smem constant byte address 0x4 - core index']
  #allocation1 [shape = 'u32[72,128]{1,0:T(1,128)}', space=vmem, size = 0x9000, scoped, tag = 'internal scratch']
  %s0 = inlined_call_operand.vmem [shape: f32[16,196], index: 0, kind: input, shape index: {}]
  %s1 = inlined_call_operand.vmem [shape: f32[196,16], index: 1, kind: input, shape index: {}]
  %s2 = inlined_call_operand.vmem [shape: f32[1,16], index: 2, kind: input, shape index: {}]
  %s3 = inlined_call_operand.vmem [shape: f32[16,10], index: 3, kind: input, shape index: {}]
  %s4 = inlined_call_operand.vmem [shape: f32[1,10], index: 4, kind: input, shape index: {}]
  %s5 = inlined_call_operand.hbm [shape: bf16[16,10], index: 5, kind: output, shape index: {}]
  %s6 = sld [smem:[#allocation0]]
  $region30: #{tpu_custom_call.1} parent=0
    _
  %s8 = ssub.s32 1, %s6
  %s9 = scalar_select 0, %s8, %s6
  $region1: #{tpu_custom_call.1} parent=0
    #allocation2 [shape = 'u8[4096]{0}', space=vmem, size = 0x1000, scoped, tag = 'output window, operand 0, single buffered']
    #allocation3 [shape = 's32[1]{0}', space=sflag, size = 0x4, scoped, tag = 'scoped memory for tpu_custom_call.1']
    %10 = vsyncpa [#allocation3], 0
    // Predicated region
    $region2: #{tpu_custom_call.1} parent=1 // pred_check
      _
    $region3: #{tpu_custom_call.1} parent=1 // pred_check_branch
      %12 = sbr.rel (0) target = $region5
    $region4: #{tpu_custom_call.1} parent=1 // pred_region
      _
    $region5: #{tpu_custom_call.1} parent=1 // pred_fallthru
      _
    // Predicated region
    $region6: #{tpu_custom_call.1} parent=1 // pred_check
      _
    $region7: #{tpu_custom_call.1} parent=1 // pred_check_branch
      %14 = sbr.rel (0) target = $region9
    $region8: #{tpu_custom_call.1} parent=1 // pred_region
      _
    $region9: #{tpu_custom_call.1} parent=1 // pred_fallthru
      _
    // Predicated region
    $region10: #{tpu_custom_call.1} parent=1 // pred_check
      _
    $region11: #{tpu_custom_call.1} parent=1 // pred_check_branch
      %16 = sbr.rel (0) target = $region13
    $region12: #{tpu_custom_call.1} parent=1 // pred_region
      _
    $region13: #{tpu_custom_call.1} parent=1 // pred_fallthru
      _
    // Predicated region
    $region14: #{tpu_custom_call.1} parent=1 // pred_check
      _
    $region15: #{tpu_custom_call.1} parent=1 // pred_check_branch
      %18 = sbr.rel (0) target = $region17
    $region16: #{tpu_custom_call.1} parent=1 // pred_region
      _
    $region17: #{tpu_custom_call.1} parent=1 // pred_fallthru
      _
    // Predicated region
    $region18: #{tpu_custom_call.1} parent=1 // pred_check
      _
    $region19: #{tpu_custom_call.1} parent=1 // pred_check_branch
      %20 = sbr.rel (0) target = $region21
    $region20: #{tpu_custom_call.1} parent=1 // pred_region
      _
    $region21: #{tpu_custom_call.1} parent=1 // pred_fallthru
      _
    %v21 = vld [vmem:[%s0] sm:$0xff]
    %v22 = vld [vmem:[%s0 + $0x8] sm:$0xff]
    %v23 = vld [vmem:[%s0 + $0x10] sm:$0xff]
    %v24 = vld [vmem:[%s0 + $0x18] sm:$0xff]
    %v25 = vld [vmem:[%s1] sm:$0xff]
    %v26 = vld [vmem:[%s1 + $0x8] sm:$0xff]
    %v27 = vld [vmem:[%s1 + $0x10] sm:$0xff]
    %v28 = vld [vmem:[%s1 + $0x18] sm:$0xff]
    %v29 = vld [vmem:[%s1 + $0x20] sm:$0xff]
    %v30 = vld [vmem:[%s1 + $0x28] sm:$0xff]
    %v31 = vld [vmem:[%s1 + $0x30] sm:$0xff]
    %v32 = vld [vmem:[%s1 + $0x38] sm:$0xff]
    %v33 = vld [vmem:[%s1 + $0x40] sm:$0xff]
    %v34 = vld [vmem:[%s1 + $0x48] sm:$0xff]
    %v35 = vld [vmem:[%s1 + $0x50] sm:$0xff]
    %v36 = vld [vmem:[%s1 + $0x58] sm:$0xff]
    %v37 = vld [vmem:[%s1 + $0x60] sm:$0xff]
    %v38 = vld [vmem:[%s1 + $0x68] sm:$0xff]
    %v39 = vld [vmem:[%s1 + $0x70] sm:$0xff]
    %v40 = vld [vmem:[%s1 + $0x78] sm:$0xff]
    %v41 = vld [vmem:[%s1 + $0x80] sm:$0xff]
    %v42 = vld [vmem:[%s1 + $0x88] sm:$0xff]
    %v43 = vld [vmem:[%s1 + $0x90] sm:$0xff]
    %v44 = vld [vmem:[%s1 + $0x98] sm:$0xff]
    %v45 = vld [vmem:[%s1 + $0xa0] sm:$0xff]
    %v46 = vld [vmem:[%s1 + $0xa8] sm:$0xff]
    %v47 = vld [vmem:[%s1 + $0xb0] sm:$0xff]
    %v48 = vld [vmem:[%s1 + $0xb8] sm:$0xff]
    %v49 = vld [vmem:[%s1 + $0xc0] sm:$0xf]
    %v50 = vld [vmem:[%s2] sm:$0x1]
    %v52 = vperm.slane %v50, 0
    %vm54 = vcmask 556032
    %v56 = vsel %vm54, %v22, 0
    %v59 = vsel %vm54, %v24, 0
    %vm61 = vcmask 1043456
    %v63 = vsel %vm61, %v49, 0
    %65 = vmatpush.msra.mxu0 %v40
    %66 = vmatpush.msra.mxu0 %v39
    %67 = vmatpush.msra.mxu0 %v38
    %68 = vmatpush.msra.mxu0 %v37
    %69 = vmatpush.msra.mxu0 %v36
    %70 = vmatpush.msra.mxu0 %v35
    %71 = vmatpush.msra.mxu0 %v34
    %72 = vmatpush.msra.mxu0 %v33
    %73 = vmatpush.msra.mxu0 %v32
    %74 = vmatpush.msra.mxu0 %v31
    %75 = vmatpush.msra.mxu0 %v30
    %76 = vmatpush.msra.mxu0 %v29
    %77 = vmatpush.msra.mxu0 %v28
    %78 = vmatpush.msra.mxu0 %v27
    %79 = vmatpush.msra.mxu0 %v26
    %80 = vmatpush.msra.mxu0 %v25
    %81 = vmatmul.f32.gmra.mxu0 %v21
    %v82 = vpop.f32.mrf.mxu0
    %v83 = vadd.f32 %v52, %v82
    %84 = vmatmul.f32.gmra.mxu0 %v23
    %v85 = vpop.f32.mrf.mxu0
    %v86 = vadd.f32 %v52, %v85
    %87 = vdwg.mxu0
    %88 = vmatpush.msra.mxu0 0.0
    %89 = vmatpush.msra.mxu0 0.0
    %90 = vmatpush.msra.mxu0 0.0
    %91 = vmatpush.msra.mxu0 0.0
    %92 = vmatpush.msra.mxu0 0.0
    %93 = vmatpush.msra.mxu0 0.0
    %94 = vmatpush.msra.mxu0 0.0
    %95 = vmatpush.msra.mxu0 %v63
    %96 = vmatpush.msra.mxu0 %v48
    %97 = vmatpush.msra.mxu0 %v47
    %98 = vmatpush.msra.mxu0 %v46
    %99 = vmatpush.msra.mxu0 %v45
    %100 = vmatpush.msra.mxu0 %v44
    %101 = vmatpush.msra.mxu0 %v43
    %102 = vmatpush.msra.mxu0 %v42
    %103 = vmatpush.msra.mxu0 %v41
    %104 = vmatmul.f32.gmra.mxu0 %v56
    %v105 = vpop.f32.mrf.mxu0
    %v106 = vadd.f32 %v83, %v105
    %107 = vmatmul.f32.gmra.mxu0 %v59
    %v108 = vpop.f32.mrf.mxu0
    %v109 = vadd.f32 %v86, %v108
    %110 = vdwg.mxu0
    %v111 = vmax.f32 %v106, 0.0
    %v112 = vmax.f32 %v109, 0.0
    %v113 = vld [vmem:[%s3] sm:$0xff]
    %v114 = vld [vmem:[%s3 + $0x8] sm:$0xff]
    %v115 = vld [vmem:[%s4] sm:$0x1]
    %v117 = vperm.slane %v115, 0
    %vm119 = vcmask 130048
    %v121 = vsel %vm119, %v111, 0
    %v124 = vsel %vm119, %v112, 0
    %126 = vmatpush.msra.mxu0 0.0
    %127 = vmatpush.msra.mxu0 0.0
    %128 = vmatpush.msra.mxu0 0.0
    %129 = vmatpush.msra.mxu0 0.0
    %130 = vmatpush.msra.mxu0 0.0
    %131 = vmatpush.msra.mxu0 0.0
    %132 = vmatpush.msra.mxu0 0.0
    %133 = vmatpush.msra.mxu0 0.0
    %134 = vmatpush.msra.mxu0 0.0
    %135 = vmatpush.msra.mxu0 0.0
    %136 = vmatpush.msra.mxu0 0.0
    %137 = vmatpush.msra.mxu0 0.0
    %138 = vmatpush.msra.mxu0 0.0
    %139 = vmatpush.msra.mxu0 0.0
    %140 = vmatpush.msra.mxu0 %v114
    %141 = vmatpush.msra.mxu0 %v113
    %142 = vmatmul.f32.gmra.mxu0 %v121
    %v143 = vpop.f32.mrf.mxu0
    %v144 = vadd.f32 %v117, %v143
    %145 = vmatmul.f32.gmra.mxu0 %v124
    %v146 = vpop.f32.mrf.mxu0
    %v147 = vadd.f32 %v117, %v146
    %148 = vdwg.mxu0
    %vm149 = vcmask 80896
    %v150 = vsel %vm149, %v144, -inf
    %151 = vmax.xlane.f32.xlu0 %v150
    %v152 = vpop.xlane.xlu0 %151
    %v153 = vsel %vm149, %v147, -inf
    %154 = vmax.xlane.f32.xlu0 %v153
    %v155 = vpop.xlane.xlu0 %154
    %v156 = vsub.f32 %v144, %v152
    %v157 = vsub.f32 %v147, %v155
    %v158 = vmul.f32 %v156, 1.442695
    %v159 = vpow.pop %v158
    %v160 = vmul.f32 %v157, 1.442695
    %v161 = vpow.pop %v160
    %v162 = vsel %vm149, %v159, 0.0
    %163 = vadd.xlane.f32.xlu0 %v162
    %v164 = vpop.xlane.xlu0 %163
    %v165 = vsel %vm149, %v161, 0.0
    %166 = vadd.xlane.f32.xlu0 %v165
    %v167 = vpop.xlane.xlu0 %166
    %v168 = vrcp.pop %v164
    %v169 = vmul.f32 %v164, %v168
    %v170 = vsub.f32 1.0, %v169
    %v171 = vmul.f32 %v168, %v170
    %v172 = vadd.f32 %v168, %v171
    %vm173 = vweird.f32 %v164
    %vm174 = vweird.f32 %v168
    %vm175 = vmor %vm173, %vm174
    %v176 = vsel %vm175, %v168, %v172
    %v177 = vand.u32 2147483647, %v164
    %vm178 = vcmp.eq.f32.partialorder %v177, 8.507059e+37
    %v179 = vand.u32 %v164, 2147483648
    %v180 = vor.u32 1.1754944e-38, %v179
    %v181 = vsel %vm178, %v180, %v176
    %v182 = vmul.f32 %v159, %v181
    %v183 = vrcp.pop %v167
    %v184 = vmul.f32 %v167, %v183
    %v185 = vsub.f32 1.0, %v184
    %v186 = vmul.f32 %v183, %v185
    %v187 = vadd.f32 %v183, %v186
    %vm188 = vweird.f32 %v167
    %vm189 = vweird.f32 %v183
    %vm190 = vmor %vm188, %vm189
    %v191 = vsel %vm190, %v183, %v187
    %v192 = vand.u32 2147483647, %v167
    %vm193 = vcmp.eq.f32.partialorder %v192, 8.507059e+37
    %v194 = vand.u32 %v167, 2147483648
    %v195 = vor.u32 1.1754944e-38, %v194
    %v196 = vsel %vm193, %v195, %v191
    %v197 = vmul.f32 %v161, %v196
    %v198 = vpack.c.bf16 %v182, %v182
    %v199 = vpack.c.bf16 %v197, %v197
    %vm200 = vcmask 76800
    %201 = vst.msk [vmem:[#allocation2] sm:$0xf] %vm200, %v198
    %202 = vst.msk [vmem:[#allocation2 + $0x4] sm:$0xf] %vm200, %v199
    // Predicated region
    $region22: #{tpu_custom_call.1} parent=1 // pred_check
      _
    $region23: #{tpu_custom_call.1} parent=1 // pred_check_branch
      %204 = sbr.rel (0) target = $region25
    $region24: #{tpu_custom_call.1} parent=1 // pred_region
      %206 = vsyncadd [#allocation3], 0
      %s207 = sshll.u32 [#allocation2], 4
      %s208 = int_to_ptr.vmem [resolvable:$true] %s207
      %s209 = sshll.u32 %s5, 4
      %s210 = int_to_ptr.hbm [resolvable:$true] %s209
      %215 = dma.vmem_to_hbm [thread:$0]  %s208, 128, %s210, [#allocation3], 64, 64, 4
    $region25: #{tpu_custom_call.1} parent=1 // pred_fallthru
      _
    // Predicated region
    $region26: #{tpu_custom_call.1} parent=1 // pred_check
      _
    $region27: #{tpu_custom_call.1} parent=1 // pred_check_branch
      %217 = sbr.rel (0) target = $region29
    $region28: #{tpu_custom_call.1} parent=1 // pred_region
      %219 = dma.done [#allocation3], 128
    $region29: #{tpu_custom_call.1} parent=1 // pred_fallthru
      _
    %220 = vsyncpa [#allocation3], 1

</llo_original>
